<compile_context>
chip_gen: v6e
topology: v6e:2x2x1
jax: 0.10.0
libtpu: 0.0.40
codegen_flags: <defaults>
</compile_context>

<pallas_src>
import jax
import jax.numpy as jnp
from jax.experimental import pallas as pl
from jax.experimental.pallas import tpu as pltpu


ROW_PACK = 32  # joints packed per lane-dense row: 32 joints * 4 coords = 128 lanes


def _angle_axis_to_rotation_matrix(angle_axis):
    """JAX port of torchgeometry.angle_axis_to_rotation_matrix: (B,3) -> (B,4,4)."""
    eps = 1e-6
    theta2 = jnp.sum(angle_axis * angle_axis, axis=1)            # (B,)
    theta = jnp.sqrt(theta2)
    wxyz = angle_axis / (theta[:, None] + eps)
    wx, wy, wz = wxyz[:, 0], wxyz[:, 1], wxyz[:, 2]
    cos_t = jnp.cos(theta)
    sin_t = jnp.sin(theta)
    one = jnp.float32(1.0)

    r00 = cos_t + wx * wx * (one - cos_t)
    r10 = wz * sin_t + wx * wy * (one - cos_t)
    r20 = -wy * sin_t + wx * wz * (one - cos_t)
    r01 = wx * wy * (one - cos_t) - wz * sin_t
    r11 = cos_t + wy * wy * (one - cos_t)
    r21 = wx * sin_t + wy * wz * (one - cos_t)
    r02 = wy * sin_t + wx * wz * (one - cos_t)
    r12 = -wx * sin_t + wy * wz * (one - cos_t)
    r22 = cos_t + wz * wz * (one - cos_t)
    rot_normal = jnp.stack(
        [r00, r01, r02, r10, r11, r12, r20, r21, r22], axis=1
    ).reshape(-1, 3, 3)

    rx, ry, rz = angle_axis[:, 0], angle_axis[:, 1], angle_axis[:, 2]
    k1 = jnp.ones_like(rx)
    rot_taylor = jnp.stack(
        [k1, -rz, ry, rz, k1, -rx, -ry, rx, k1], axis=1
    ).reshape(-1, 3, 3)

    mask = (theta2 > eps)[:, None, None]
    rot3 = jnp.where(mask, rot_normal, rot_taylor)

    b = angle_axis.shape[0]
    rot4 = jnp.tile(jnp.eye(4, dtype=angle_axis.dtype)[None], (b, 1, 1))
    rot4 = rot4.at[:, :3, :3].set(rot3)
    return rot4


def _transform_kernel(j_ref, r_ref, t_ref, o_ref):
    # j_ref: (tm, 128) lane-dense joint tile (32 joints per row), streamed in the
    #        INPUT dtype (no wrapper-side upcast -> minimal HBM traffic).
    # r_ref: (128, 128) block-diagonal rotation (input dtype if sub-32-bit, else f32).
    # t_ref: (1, 128) tiled translation bias (f32).
    out = jnp.dot(j_ref[...], r_ref[...], preferred_element_type=jnp.float32)
    out = out + t_ref[...]
    o_ref[...] = out.astype(o_ref.dtype)
    # TODO(synk): if v5e/v7x profiles show the f32 MXU multi-pass co-critical with
    # HBM, replace the dot with the exact 7-tap pltpu.roll + (1,128)-weight VPU/XLU
    # formulation (or ROW_PACK=64 / bf16 operands) to keep the kernel memory-bound.


def _round_up(x, m):
    return ((x + m - 1) // m) * m


def transform_forward(joints, orientation, translation, *,
                      block_rows=8192, min_pallas_joints=65536):
    """joints: (B, N, 4) -> (B, N, 4) computing joints @ R(orientation) + pad(t, 1)."""
    B, N, D = joints.shape
    assert D == 4, "joints must be homogeneous (last dim = 4)"
    dtype = joints.dtype
    M = B * N

    # ---- Parameter setup (tiny scalar math, plain JAX, f32) ----
    R = _angle_axis_to_rotation_matrix(orientation.astype(jnp.float32))[0]        # (4, 4)
    t = jnp.pad(translation.astype(jnp.float32), (0, 1), constant_values=1.0)     # (4,)

    # ---- Small-problem dispatch: pallas_call launch + pipeline prologue is several
    # microseconds of fixed cost; plain fused XLA wins outright at small M.
    if M < min_pallas_joints:
        out = jnp.matmul(joints.astype(jnp.float32).reshape(M, 4), R) + t
        return out.astype(dtype).reshape(B, N, 4)

    # ---- Lane-dense operands ----
    # Keep streamed data in the input dtype; only the (128,128) rotation follows a
    # sub-32-bit input dtype (halves its already tiny footprint and lets the MXU run
    # native bf16 with f32 accumulation). Translation bias stays f32.
    r_dtype = dtype if jnp.dtype(dtype).itemsize < 4 else jnp.float32
    R128 = jnp.kron(jnp.eye(ROW_PACK, dtype=jnp.float32), R).astype(r_dtype)      # (128, 128)
    t128 = jnp.tile(t, ROW_PACK)[None, :]                                         # (1, 128) f32

    # ---- Lane-dense view.  Only pad to a ROW_PACK multiple (<= 31 joints); the
    # common M % 32 == 0 case keeps (M,4) -> (Mr,128) a zero-cost bitcast.
    M_pad = _round_up(M, ROW_PACK)
    j_flat = joints.reshape(M, 4)
    if M_pad != M:
        # TODO(synk): process this <32-joint tail in plain JAX instead to avoid the copy.
        j_flat = jnp.concatenate(
            [j_flat, jnp.zeros((M_pad - M, 4), dtype=dtype)], axis=0
        )
    Mr = M_pad // ROW_PACK
    j_dense = j_flat.reshape(Mr, 128)

    # ---- Row tile.  Whole array if it fits one block; otherwise a sublane-aligned
    # tile with a masked partial last block (grid via cdiv -- no tile-multiple pad).
    sublane = 8 * max(1, 4 // jnp.dtype(dtype).itemsize)   # 8 f32, 16 bf16, 32 int8/fp8
    if Mr <= block_rows:
        tm = Mr                                            # block == full array dims
    else:
        tm = max((block_rows // sublane) * sublane, sublane)
    grid = (pl.cdiv(Mr, tm),)

    out_dense = pl.pallas_call(
        _transform_kernel,
        out_shape=jax.ShapeDtypeStruct((Mr, 128), dtype),
        grid_spec=pltpu.PrefetchScalarGridSpec(
            num_scalar_prefetch=0,
            grid=grid,
            in_specs=[
                pl.BlockSpec((tm, 128), lambda i: (i, 0)),
                pl.BlockSpec((128, 128), lambda i: (0, 0)),
                pl.BlockSpec((1, 128), lambda i: (0, 0)),
            ],
            out_specs=pl.BlockSpec((tm, 128), lambda i: (i, 0)),
        ),
        compiler_params=pltpu.CompilerParams(
            dimension_semantics=("parallel",),
            vmem_limit_bytes=32 * 1024 * 1024,
        ),
    )(j_dense, R128, t128)

    out = out_dense.reshape(M_pad, 4)
    if M_pad != M:                       # guard the epilogue slice (it is a real copy)
        out = out[:M]
    return out.reshape(B, N, 4)


if __name__ == "__main__":
    key = jax.random.PRNGKey(0)
    k_t, k_o, k_j = jax.random.split(key, 3)

    # Deterministic "parameters" matching the module's __init__ (torch.rand -> U[0,1)).
    translation = jax.random.uniform(k_t, (3,), dtype=jnp.float32)
    orientation = jax.random.uniform(k_o, (1, 3), dtype=jnp.float32)

    # Small example input: batch=2, 8 joints, homogeneous coords (x, y, z, 1).
    B, N = 2, 8
    xyz = jax.random.normal(k_j, (B, N, 3), dtype=jnp.float32)
    joints = jnp.concatenate([xyz, jnp.ones((B, N, 1), jnp.float32)], axis=-1)

    # Pure-JAX reference (same math as the torch module).
    R_ref = _angle_axis_to_rotation_matrix(orientation)          # (1, 4, 4)
    t_ref = jnp.pad(translation, (0, 1), constant_values=1.0)    # (4,)
    ref = jnp.matmul(joints, R_ref) + t_ref                      # broadcast like torch

    # Force the Pallas path even at this tiny size so the kernel is exercised.
    out = transform_forward(joints, orientation, translation, min_pallas_joints=0)
    out = jax.block_until_ready(out)
    assert out.shape == (B, N, 4)
    assert jnp.allclose(out, ref, atol=1e-5, rtol=1e-5), "pallas path mismatch vs reference"

    # Default dispatch path (small M -> plain XLA) must agree too.
    out_xla = jax.block_until_ready(transform_forward(joints, orientation, translation))
    assert jnp.allclose(out_xla, ref, atol=1e-5, rtol=1e-5), "xla path mismatch vs reference"

    print("KERNEL_OK")
</pallas_src>

<mosaic_0001>
module attributes {stable_mosaic.version = 11 : i64} {
  func.func @_transform_kernel(%arg0: i32, %arg1: memref<1x128xf32, #tpu.memory_space<vmem>>, %arg2: memref<128x128xf32, #tpu.memory_space<vmem>>, %arg3: memref<1x128xf32, #tpu.memory_space<vmem>>, %arg4: memref<1x128xf32, #tpu.memory_space<vmem>>) attributes {dimension_semantics = [#tpu.dimension_semantics<parallel>], iteration_bounds = array<i64: 1>, scalar_prefetch = 0 : i64, scratch_operands = 0 : i64, tpu.core_type = #tpu.core_type<tc>, window_params = [{transform_indices = @transform_0, window_bounds = array<i64: 1, 128>}, {pipeline_mode = #tpu.pipeline_mode<synchronous>, transform_indices = @transform_1, window_bounds = array<i64: 128, 128>}, {pipeline_mode = #tpu.pipeline_mode<synchronous>, transform_indices = @transform_2, window_bounds = array<i64: 1, 128>}, {transform_indices = @transform_3, window_bounds = array<i64: 1, 128>}]} {
    %c0 = arith.constant 0 : index
    %c0_0 = arith.constant 0 : index
    %0 = vector.load %arg1[%c0, %c0_0] : memref<1x128xf32, #tpu.memory_space<vmem>>, vector<1x128xf32>
    %c0_1 = arith.constant 0 : index
    %c0_2 = arith.constant 0 : index
    %1 = vector.load %arg2[%c0_1, %c0_2] : memref<128x128xf32, #tpu.memory_space<vmem>>, vector<128x128xf32>
    %cst = arith.constant dense<0.000000e+00> : vector<1x128xf32>
    %2 = tpu.matmul %0, %1, %cst {dimension_numbers = #tpu.dot_dimension_numbers<[1], [0], [0], [1], [0, 0, 1, 1], [], []>} : vector<1x128xf32>, vector<128x128xf32>, vector<1x128xf32> -> vector<1x128xf32>
    %c0_3 = arith.constant 0 : index
    %c0_4 = arith.constant 0 : index
    %3 = vector.load %arg3[%c0_3, %c0_4] : memref<1x128xf32, #tpu.memory_space<vmem>>, vector<1x128xf32>
    %4 = arith.addf %2, %3 : vector<1x128xf32>
    %c0_5 = arith.constant 0 : index
    %c0_6 = arith.constant 0 : index
    %5 = vector.load %arg4[%c0_5, %c0_6] : memref<1x128xf32, #tpu.memory_space<vmem>>, vector<1x128xf32>
    tpu.vector_store %arg4[%c0_5, %c0_6], %4 {strides = array<i32>} : memref<1x128xf32, #tpu.memory_space<vmem>>, vector<1x128xf32>,
    return
  }
  func.func @transform_0(%arg0: i32) -> (i32, i32) {
    %c0_i32 = arith.constant 0 : i32
    %c0_i32_0 = arith.constant 0 : i32
    return %arg0, %c0_i32 : i32, i32
  }
  func.func @transform_1(%arg0: i32) -> (i32, i32) {
    %c0_i32 = arith.constant 0 : i32
    %c0_i32_0 = arith.constant 0 : i32
    %c0_i32_1 = arith.constant 0 : i32
    return %c0_i32, %c0_i32_0 : i32, i32
  }
  func.func @transform_2(%arg0: i32) -> (i32, i32) {
    %c0_i32 = arith.constant 0 : i32
    %c0_i32_0 = arith.constant 0 : i32
    %c0_i32_1 = arith.constant 0 : i32
    return %c0_i32, %c0_i32_0 : i32, i32
  }
  func.func @transform_3(%arg0: i32) -> (i32, i32) {
    %c0_i32 = arith.constant 0 : i32
    %c0_i32_0 = arith.constant 0 : i32
    return %arg0, %c0_i32 : i32, i32
  }
}

</mosaic_0001>

<llo_original>
// kernel: tpu_custom_call.1
$region0: #{tpu_custom_call.1}
  #allocation0 [shape = 'u32[]', space=smem, size = 0x4, offset = 0x4, fixed_abs, tag = 'smem constant byte address 0x4 - core index']
  #allocation1 [shape = 'u32[144,128]{1,0:T(1,128)}', space=vmem, size = 0x12000, scoped, tag = 'internal scratch']
  %s0 = inlined_call_operand.hbm [shape: f32[1,128], index: 0, kind: input, shape index: {}]
  %s1 = inlined_call_operand.hbm [shape: f32[128,128], index: 1, kind: input, shape index: {}]
  %s2 = inlined_call_operand.vmem [shape: f32[1,128], index: 2, kind: input, shape index: {}]
  %s3 = inlined_call_operand.hbm [shape: f32[1,128], index: 3, kind: output, shape index: {}]
  %s4 = sld [smem:[#allocation0]]
  $region30: #{tpu_custom_call.1} parent=0
    _
  %s6 = ssub.s32 1, %s4
  %s7 = scalar_select 0, %s6, %s4
  $region1: #{tpu_custom_call.1} parent=0
    #allocation2 [shape = 'u8[512]{0}', space=vmem, size = 0x400, scoped, tag = 'input window, operand 0, single buffered']
    #allocation3 [shape = 's32[1]{0}', space=sflag, size = 0x4, scoped, tag = 'scoped memory for tpu_custom_call.1']
    #allocation4 [shape = 's32[1]{0}', space=sflag, size = 0x4, scoped, tag = 'scoped memory for tpu_custom_call.1']
    #allocation5 [shape = 'u8[65536]{0}', space=vmem, size = 0x10000, scoped, tag = 'input window, operand 1, single buffered']
    #allocation6 [shape = 's32[1]{0}', space=sflag, size = 0x4, scoped, tag = 'scoped memory for tpu_custom_call.1']
    #allocation7 [shape = 'u8[512]{0}', space=vmem, size = 0x400, scoped, tag = 'output window, operand 0, single buffered']
    %8 = vsyncpa [#allocation3], 0
    %9 = vsyncpa [#allocation6], 0
    %10 = vsyncpa [#allocation4], 0
    // Predicated region
    $region2: #{tpu_custom_call.1} parent=1 // pred_check
      _
    $region3: #{tpu_custom_call.1} parent=1 // pred_check_branch
      %12 = sbr.rel (0) target = $region5
    $region4: #{tpu_custom_call.1} parent=1 // pred_region
      %s14 = ssub.s32 16, 16
      %15 = vsyncadd [#allocation3], %s14
      %s17 = sshll.u32 [#allocation2], 4
      %s18 = int_to_ptr.vmem [resolvable:$true] %s17
      %20 = dma.hbm_to_vmem [thread:$0]  %s0, 16, %s18, [#allocation3]
    $region5: #{tpu_custom_call.1} parent=1 // pred_fallthru
      _
    // Predicated region
    $region6: #{tpu_custom_call.1} parent=1 // pred_check
      _
    $region7: #{tpu_custom_call.1} parent=1 // pred_check_branch
      %22 = sbr.rel (0) target = $region9
    $region8: #{tpu_custom_call.1} parent=1 // pred_region
      %s24 = ssub.s32 2048, 2048
      %25 = vsyncadd [#allocation6], %s24
      %s26 = sshll.u32 [#allocation5], 4
      %s27 = int_to_ptr.vmem [resolvable:$true] %s26
      %32 = dma.hbm_to_vmem [thread:$0]  %s1, 2048, %s27, [#allocation6], 128, 128, 8
    $region9: #{tpu_custom_call.1} parent=1 // pred_fallthru
      _
    // Predicated region
    $region10: #{tpu_custom_call.1} parent=1 // pred_check
      _
    $region11: #{tpu_custom_call.1} parent=1 // pred_check_branch
      %34 = sbr.rel (0) target = $region13
    $region12: #{tpu_custom_call.1} parent=1 // pred_region
      _
    $region13: #{tpu_custom_call.1} parent=1 // pred_fallthru
      _
    // Predicated region
    $region14: #{tpu_custom_call.1} parent=1 // pred_check
      _
    $region15: #{tpu_custom_call.1} parent=1 // pred_check_branch
      %36 = sbr.rel (0) target = $region17
    $region16: #{tpu_custom_call.1} parent=1 // pred_region
      %37 = dma.done [#allocation3], 16
    $region17: #{tpu_custom_call.1} parent=1 // pred_fallthru
      _
    // Predicated region
    $region18: #{tpu_custom_call.1} parent=1 // pred_check
      _
    $region19: #{tpu_custom_call.1} parent=1 // pred_check_branch
      %39 = sbr.rel (0) target = $region21
    $region20: #{tpu_custom_call.1} parent=1 // pred_region
      %40 = dma.done [#allocation6], 2048
    $region21: #{tpu_custom_call.1} parent=1 // pred_fallthru
      _
    %v41 = vld [vmem:[#allocation2] sm:$0x1]
    %v42 = vld [vmem:[#allocation5] sm:$0xff]
    %v43 = vld [vmem:[#allocation5 + $0x8] sm:$0xff]
    %v44 = vld [vmem:[#allocation5 + $0x10] sm:$0xff]
    %v45 = vld [vmem:[#allocation5 + $0x18] sm:$0xff]
    %v46 = vld [vmem:[#allocation5 + $0x20] sm:$0xff]
    %v47 = vld [vmem:[#allocation5 + $0x28] sm:$0xff]
    %v48 = vld [vmem:[#allocation5 + $0x30] sm:$0xff]
    %v49 = vld [vmem:[#allocation5 + $0x38] sm:$0xff]
    %v50 = vld [vmem:[#allocation5 + $0x40] sm:$0xff]
    %v51 = vld [vmem:[#allocation5 + $0x48] sm:$0xff]
    %v52 = vld [vmem:[#allocation5 + $0x50] sm:$0xff]
    %v53 = vld [vmem:[#allocation5 + $0x58] sm:$0xff]
    %v54 = vld [vmem:[#allocation5 + $0x60] sm:$0xff]
    %v55 = vld [vmem:[#allocation5 + $0x68] sm:$0xff]
    %v56 = vld [vmem:[#allocation5 + $0x70] sm:$0xff]
    %v57 = vld [vmem:[#allocation5 + $0x78] sm:$0xff]
    %v58 = vld [vmem:[%s2] sm:$0x1]
    %59 = vmatprep.subr.mxu0 0.0
    %60 = vmatpush1.msra.mxu0 %v57
    %61 = vmatprep.subr.mxu0 0.0
    %62 = vmatpush1.msra.mxu0 %v56
    %63 = vmatprep.subr.mxu0 0.0
    %64 = vmatpush1.msra.mxu0 %v55
    %65 = vmatprep.subr.mxu0 0.0
    %66 = vmatpush1.msra.mxu0 %v54
    %67 = vmatprep.subr.mxu0 0.0
    %68 = vmatpush1.msra.mxu0 %v53
    %69 = vmatprep.subr.mxu0 0.0
    %70 = vmatpush1.msra.mxu0 %v52
    %71 = vmatprep.subr.mxu0 0.0
    %72 = vmatpush1.msra.mxu0 %v51
    %73 = vmatprep.subr.mxu0 0.0
    %74 = vmatpush1.msra.mxu0 %v50
    %75 = vmatprep.subr.mxu0 0.0
    %76 = vmatpush1.msra.mxu0 %v49
    %77 = vmatprep.subr.mxu0 0.0
    %78 = vmatpush1.msra.mxu0 %v48
    %79 = vmatprep.subr.mxu0 0.0
    %80 = vmatpush1.msra.mxu0 %v47
    %81 = vmatprep.subr.mxu0 0.0
    %82 = vmatpush1.msra.mxu0 %v46
    %83 = vmatprep.subr.mxu0 0.0
    %84 = vmatpush1.msra.mxu0 %v45
    %85 = vmatprep.subr.mxu0 0.0
    %86 = vmatpush1.msra.mxu0 %v44
    %87 = vmatprep.subr.mxu0 0.0
    %88 = vmatpush1.msra.mxu0 %v43
    %89 = vmatprep.subr.mxu0 0.0
    %90 = vmatpush1.msra.mxu0 %v42
    %91 = vmatprep.subr.mxu0 0.0
    %92 = vmatpush2.msra.mxu0 0.0
    %93 = vmatprep.subr.mxu0 0.0
    %94 = vmatpush2.msra.mxu0 0.0
    %95 = vmatprep.subr.mxu0 0.0
    %96 = vmatpush2.msra.mxu0 0.0
    %97 = vmatprep.subr.mxu0 0.0
    %98 = vmatpush2.msra.mxu0 0.0
    %99 = vmatprep.subr.mxu0 0.0
    %100 = vmatpush2.msra.mxu0 0.0
    %101 = vmatprep.subr.mxu0 0.0
    %102 = vmatpush2.msra.mxu0 0.0
    %103 = vmatprep.subr.mxu0 0.0
    %104 = vmatpush2.msra.mxu0 0.0
    %105 = vmatprep.subr.mxu0 0.0
    %106 = vmatpush2.msra.mxu0 0.0
    %107 = vmatprep.subr.mxu0 0.0
    %108 = vmatpush2.msra.mxu0 0.0
    %109 = vmatprep.subr.mxu0 0.0
    %110 = vmatpush2.msra.mxu0 0.0
    %111 = vmatprep.subr.mxu0 0.0
    %112 = vmatpush2.msra.mxu0 0.0
    %113 = vmatprep.subr.mxu0 0.0
    %114 = vmatpush2.msra.mxu0 0.0
    %115 = vmatprep.subr.mxu0 0.0
    %116 = vmatpush2.msra.mxu0 0.0
    %117 = vmatprep.subr.mxu0 0.0
    %118 = vmatpush2.msra.mxu0 0.0
    %119 = vmatprep.subr.mxu0 0.0
    %120 = vmatpush2.msra.mxu0 0.0
    %121 = vmatprep.subr.mxu0 0.0
    %122 = vmatpush2.msra.mxu0 0.0
    %123 = vmatprep.mubr.f32.mxu0 0.0
    %124 = vmatmul.mubr.f32.gmra.mxu0 %v41
    %v125 = vpop.f32.mrf.mxu0
    %v126 = vadd.f32 %v58, %v125
    %v127 = vpop.f32.mrf.mxu0
    %128 = vdwg.mxu0
    %129 = vst [vmem:[#allocation7] sm:$0x1] %v126
    // Predicated region
    $region22: #{tpu_custom_call.1} parent=1 // pred_check
      _
    $region23: #{tpu_custom_call.1} parent=1 // pred_check_branch
      %131 = sbr.rel (0) target = $region25
    $region24: #{tpu_custom_call.1} parent=1 // pred_region
      %s133 = ssub.s32 16, 16
      %134 = vsyncadd [#allocation4], %s133
      %s136 = sshll.u32 [#allocation7], 4
      %s137 = int_to_ptr.vmem [resolvable:$true] %s136
      %139 = dma.vmem_to_hbm [thread:$0]  %s137, 16, %s3, [#allocation4]
    $region25: #{tpu_custom_call.1} parent=1 // pred_fallthru
      _
    // Predicated region
    $region26: #{tpu_custom_call.1} parent=1 // pred_check
      _
    $region27: #{tpu_custom_call.1} parent=1 // pred_check_branch
      %141 = sbr.rel (0) target = $region29
    $region28: #{tpu_custom_call.1} parent=1 // pred_region
      %142 = dma.done [#allocation4], 16
    $region29: #{tpu_custom_call.1} parent=1 // pred_fallthru
      _
    %143 = vsyncpa [#allocation3], 1
    %144 = vsyncpa [#allocation6], 1
    %145 = vsyncpa [#allocation4], 1

</llo_original>
